<compile_context>
chip_gen: v6e
topology: v6e:2x2x1
jax: 0.10.0
libtpu: 0.0.40
codegen_flags: <defaults>
</compile_context>

<pallas_src>
import functools
import math

import jax
import jax.numpy as jnp
from jax.experimental import pallas as pl
from jax.experimental.pallas import tpu as pltpu


# ----------------------------- kernels --------------------------------------

def _pe_add_kernel(x_ref, pe_ref, o_ref):
    # x_ref: (TS, B, D); pe_ref: (TS, D) -> broadcast over batch (sublanes).
    o_ref[...] = (x_ref[...] + pe_ref[...][:, None, :]).astype(o_ref.dtype)


def _pe_add_dropout_hwprng_kernel(seed_ref, x_ref, pe_ref, o_ref, *, p,
                                  compute_dtype):
    """Inverted dropout on (x + pe) using the TPU hardware PRNG (TPU only)."""
    # TODO(synk): torch's dropout RNG stream (Philox) cannot be bit-matched;
    # only the dropout *semantics* are reproduced.
    i = pl.program_id(0)
    # Decorrelate tiles with a large odd multiplier; int32 wrap-around is fine.
    pltpu.prng_seed(seed_ref[0] + i * jnp.int32(-1640531535))

    y = (x_ref[...] + pe_ref[...][:, None, :]).astype(compute_dtype)

    bits = pltpu.prng_random_bits(y.shape)
    # Integer threshold compare directly in the PRNG's native integer domain.
    if jnp.issubdtype(bits.dtype, jnp.unsignedinteger):
        thr = jnp.array(int(p * (1 << 32)), dtype=bits.dtype)
    else:  # signed int32 bits: same test with the threshold shifted into range
        thr = jnp.array(int(p * (1 << 32)) - (1 << 31), dtype=jnp.int32)
    keep = bits >= thr                       # P(keep) = 1 - p

    scale = 1.0 / (1.0 - p)
    o_ref[...] = jnp.where(keep, y * scale, 0.0).astype(o_ref.dtype)


def _pe_add_dropout_mask_kernel(x_ref, pe_ref, u_ref, o_ref, *, p,
                                compute_dtype):
    """Portable dropout path: uniform mask `u` is generated in the wrapper."""
    y = (x_ref[...] + pe_ref[...][:, None, :]).astype(compute_dtype)
    keep = u_ref[...] >= jnp.float32(p)      # P(keep) = 1 - p
    scale = 1.0 / (1.0 - p)
    o_ref[...] = jnp.where(keep, y * scale, 0.0).astype(o_ref.dtype)


# ----------------------------- helpers ---------------------------------------

def make_pe_table(d_model: int, max_len: int = 5000, dtype=jnp.float32):
    """Deterministic sinusoidal PE table, shape [max_len, 1, d_model]."""
    position = jnp.arange(max_len, dtype=jnp.float32)[:, None]            # [L,1]
    div_term = jnp.exp(jnp.arange(0, d_model, 2, dtype=jnp.float32)
                       * (-math.log(10000.0) / d_model))                  # [D/2]
    pe = jnp.zeros((max_len, 1, d_model), dtype=jnp.float32)
    pe = pe.at[:, 0, 0::2].set(jnp.sin(position * div_term))
    pe = pe.at[:, 0, 1::2].set(jnp.cos(position * div_term))
    return pe.astype(dtype)


def _round_up(n, m):
    return -(-n // m) * m


def _vmem_budget_bytes():
    """~Half of the core's physical VMEM, capped at 64 MiB.

    v5e/v6e (128 MiB physical) -> 64 MiB; v7x (64 MiB physical) -> 32 MiB.
    Falls back to a conservative 32 MiB when no TPU is visible (interpret).
    """
    try:
        cap = int(pltpu.get_tpu_info().vmem_capacity_bytes)
    except Exception:
        cap = 64 * 1024 * 1024
    return max(16 * 1024 * 1024, min(cap // 2, 64 * 1024 * 1024))


def _choose_seq_tile(S, B, D, itemsize, n_streams, vmem_budget):
    """Pick TS so the double-buffered big streams fit the VMEM budget."""
    # Padded per-seq-row footprint of one (1, B, D) slab: B -> sublanes (pad 8),
    # D -> lanes (pad 128).
    padded_row = _round_up(B, 8) * _round_up(D, 128) * itemsize
    # n_streams big buffers, double-buffered, +2 buffers of slop for pe/scratch.
    per_buf = max(vmem_budget // (2 * n_streams + 2), padded_row)
    ts = max(1, per_buf // padded_row)

    # Guarantee >= 2 tiles (>= 4 for long sequences) so the "parallel" axis can
    # span both v7x TensorCores and the DMA pipeline has steps to overlap.
    min_tiles = 4 if S >= 64 else (2 if S >= 2 else 1)
    ts = min(ts, -(-S // min_tiles))

    if ts >= S:
        return int(S)
    # pe is passed as a 2-D [S, D] array, so its (TS, D) block puts TS on the
    # sublane axis: TS must be a multiple of 8 unless it covers all of S.
    if ts >= 8:
        ts -= ts % 8
    else:
        ts = min(8, S)
    return int(ts)


# ----------------------------- wrapper ---------------------------------------

def positional_encoding(x, pe_table, *, dropout_p=0.1, training=False, seed=0):
    """x: [seq_len, batch, d_model]; pe_table: [max_len, 1, d_model]."""
    S, B, D = x.shape
    pe = pe_table[:S, 0, :].astype(x.dtype)            # lane-dense [S, D]

    apply_dropout = bool(training) and dropout_p > 0.0
    if apply_dropout and dropout_p >= 1.0:
        return jnp.zeros_like(x)

    # Hardware PRNG only lowers on real TPU; everywhere else (e.g. CPU
    # interpret) stream a precomputed uniform mask through the kernel.
    use_hw_prng = apply_dropout and jax.default_backend() == "tpu"
    use_mask_input = apply_dropout and not use_hw_prng

    itemsize = jnp.dtype(x.dtype).itemsize
    n_streams = 3 if use_mask_input else 2              # big HBM streams
    vmem_budget = _vmem_budget_bytes()
    ts = _choose_seq_tile(S, B, D, itemsize, n_streams, vmem_budget)
    n_tiles = pl.cdiv(S, ts)

    # index_maps receive (*grid_ids, *scalar_prefetch_refs); `*_` swallows the
    # seed ref on the hardware-PRNG path.
    x_spec = pl.BlockSpec((ts, B, D), lambda i, *_: (i, 0, 0))
    pe_spec = pl.BlockSpec((ts, D), lambda i, *_: (i, 0))
    out_spec = pl.BlockSpec((ts, B, D), lambda i, *_: (i, 0, 0))
    out_shape = jax.ShapeDtypeStruct((S, B, D), x.dtype)

    cp = pltpu.CompilerParams(
        dimension_semantics=("parallel",),   # independent seq tiles
        vmem_limit_bytes=int(vmem_budget),
    )

    if not apply_dropout:
        return pl.pallas_call(
            _pe_add_kernel,
            out_shape=out_shape,
            grid_spec=pltpu.PrefetchScalarGridSpec(
                num_scalar_prefetch=0,
                grid=(n_tiles,),
                in_specs=[x_spec, pe_spec],
                out_specs=out_spec,
            ),
            compiler_params=cp,
        )(x, pe)

    # Dropout arithmetic: native bf16 on bf16 inputs (packed VALU on v6e/v7x),
    # f32 otherwise.
    if x.dtype == jnp.bfloat16 or x.dtype == jnp.float32:
        compute_dtype = x.dtype
    else:
        compute_dtype = jnp.float32
    p = float(dropout_p)

    if use_hw_prng:
        seed_arr = jnp.asarray([seed], dtype=jnp.int32)
        kern = functools.partial(_pe_add_dropout_hwprng_kernel, p=p,
                                 compute_dtype=compute_dtype)
        return pl.pallas_call(
            kern,
            out_shape=out_shape,
            grid_spec=pltpu.PrefetchScalarGridSpec(
                num_scalar_prefetch=1,           # seed lands in SMEM
                grid=(n_tiles,),
                in_specs=[x_spec, pe_spec],
                out_specs=out_spec,
            ),
            compiler_params=cp,
        )(seed_arr, x, pe)

    # Portable fallback: uniform mask streamed into the kernel.
    u = jax.random.uniform(jax.random.PRNGKey(seed), (S, B, D),
                           dtype=jnp.float32)
    u_spec = pl.BlockSpec((ts, B, D), lambda i, *_: (i, 0, 0))
    kern = functools.partial(_pe_add_dropout_mask_kernel, p=p,
                             compute_dtype=compute_dtype)
    return pl.pallas_call(
        kern,
        out_shape=out_shape,
        grid_spec=pltpu.PrefetchScalarGridSpec(
            num_scalar_prefetch=0,
            grid=(n_tiles,),
            in_specs=[x_spec, pe_spec, u_spec],
            out_specs=out_spec,
        ),
        compiler_params=cp,
    )(x, pe, u)


# ----------------------------- main ------------------------------------------

if __name__ == "__main__":
    # Small but layout-representative shapes: d_model multiple of 128 (lane
    # dense), batch multiple of 8 (sublane dense); tiling yields 2 grid steps.
    d_model = 128
    seq_len = 16
    batch = 8
    max_len = 64   # keep the table small for the demo (module default is 5000)

    key = jax.random.PRNGKey(0)
    x = jax.random.normal(key, (seq_len, batch, d_model), dtype=jnp.float32)
    pe_table = make_pe_table(d_model, max_len=max_len, dtype=jnp.float32)

    # Eval-mode forward (dropout = identity) — deterministic.
    out = positional_encoding(x, pe_table, dropout_p=0.1, training=False)
    out = jax.block_until_ready(out)

    ref = x + pe_table[:seq_len]          # [S,1,D] broadcasts over batch
    assert out.shape == (seq_len, batch, d_model)
    assert out.dtype == x.dtype
    assert jnp.allclose(out, ref, atol=1e-6), "eval-mode mismatch vs reference"

    # Train-mode (dropout): check dropout *semantics* (keep rate and inverted
    # scaling), not torch's RNG stream.
    p = 0.1
    out_tr = positional_encoding(x, pe_table, dropout_p=p, training=True,
                                 seed=123)
    out_tr = jax.block_until_ready(out_tr)
    kept = out_tr != 0.0
    keep_frac = float(jnp.mean(kept.astype(jnp.float32)))
    assert 0.8 <= keep_frac <= 0.97, f"unexpected dropout keep fraction {keep_frac}"
    scaled_ref = ref / (1.0 - p)
    assert jnp.allclose(jnp.where(kept, out_tr, 0.0),
                        jnp.where(kept, scaled_ref, 0.0),
                        rtol=1e-5, atol=1e-5), "kept values not scaled by 1/(1-p)"

    print("KERNEL_OK")
</pallas_src>

<mosaic_0001>
module attributes {stable_mosaic.version = 11 : i64} {
  func.func @_pe_add_kernel(%arg0: i32, %arg1: memref<8x8x128xf32, #tpu.memory_space<vmem>>, %arg2: memref<8x128xf32, #tpu.memory_space<vmem>>, %arg3: memref<8x8x128xf32, #tpu.memory_space<vmem>>) attributes {dimension_semantics = [#tpu.dimension_semantics<parallel>], iteration_bounds = array<i64: 2>, scalar_prefetch = 0 : i64, scratch_operands = 0 : i64, tpu.core_type = #tpu.core_type<tc>, window_params = [{transform_indices = @transform_0, window_bounds = array<i64: 8, 8, 128>}, {transform_indices = @transform_1, window_bounds = array<i64: 8, 128>}, {transform_indices = @transform_2, window_bounds = array<i64: 8, 8, 128>}]} {
    %c0 = arith.constant 0 : index
    %c0_0 = arith.constant 0 : index
    %c0_1 = arith.constant 0 : index
    %0 = vector.load %arg1[%c0, %c0_0, %c0_1] : memref<8x8x128xf32, #tpu.memory_space<vmem>>, vector<8x8x128xf32>
    %c0_2 = arith.constant 0 : index
    %c0_3 = arith.constant 0 : index
    %1 = vector.load %arg2[%c0_2, %c0_3] : memref<8x128xf32, #tpu.memory_space<vmem>>, vector<8x128xf32>
    %2 = vector.shape_cast %1 : vector<8x128xf32> to vector<8x1x128xf32>
    %3 = vector.broadcast %2 : vector<8x1x128xf32> to vector<8x8x128xf32>
    %4 = arith.addf %0, %3 : vector<8x8x128xf32>
    %c0_4 = arith.constant 0 : index
    %c0_5 = arith.constant 0 : index
    %c0_6 = arith.constant 0 : index
    %5 = vector.load %arg3[%c0_4, %c0_5, %c0_6] : memref<8x8x128xf32, #tpu.memory_space<vmem>>, vector<8x8x128xf32>
    tpu.vector_store %arg3[%c0_4, %c0_5, %c0_6], %4 {strides = array<i32>} : memref<8x8x128xf32, #tpu.memory_space<vmem>>, vector<8x8x128xf32>,
    return
  }
  func.func @transform_0(%arg0: i32) -> (i32, i32, i32) {
    %c0_i32 = arith.constant 0 : i32
    %c0_i32_0 = arith.constant 0 : i32
    %c0_i32_1 = arith.constant 0 : i32
    return %arg0, %c0_i32, %c0_i32_0 : i32, i32, i32
  }
  func.func @transform_1(%arg0: i32) -> (i32, i32) {
    %c0_i32 = arith.constant 0 : i32
    %c0_i32_0 = arith.constant 0 : i32
    return %arg0, %c0_i32 : i32, i32
  }
  func.func @transform_2(%arg0: i32) -> (i32, i32, i32) {
    %c0_i32 = arith.constant 0 : i32
    %c0_i32_0 = arith.constant 0 : i32
    %c0_i32_1 = arith.constant 0 : i32
    return %arg0, %c0_i32, %c0_i32_0 : i32, i32, i32
  }
}

</mosaic_0001>

<llo_original>
// kernel: tpu_custom_call.1
$region0: #{tpu_custom_call.1}
  #allocation0 [shape = 'u32[]', space=smem, size = 0x4, offset = 0x4, fixed_abs, tag = 'smem constant byte address 0x4 - core index']
  #allocation1 [shape = 'u32[144,128]{1,0:T(1,128)}', space=vmem, size = 0x12000, scoped, tag = 'internal scratch']
  %s0 = inlined_call_operand.hbm [shape: f32[16,8,128], index: 0, kind: input, shape index: {}]
  %s1 = inlined_call_operand.hbm [shape: f32[16,128], index: 1, kind: input, shape index: {}]
  %s2 = inlined_call_operand.hbm [shape: f32[16,8,128], index: 2, kind: output, shape index: {}]
  %s3 = sld [smem:[#allocation0]]
  $region49: #{tpu_custom_call.1} parent=0
    _
  %s5 = ssub.s32 1, %s3
  %s6 = scalar_select 0, %s5, %s3
  $region1: #{tpu_custom_call.1} parent=0
    #allocation2 [shape = 'u8[65536]{0}', space=vmem, size = 0x10000, scoped, tag = 'input window, operand 0']
    #allocation3 [shape = 's32[2]{0}', space=sflag, size = 0x8, scoped, tag = 'scoped memory for tpu_custom_call.1']
    #allocation4 [shape = 's32[2]{0}', space=sflag, size = 0x8, scoped, tag = 'scoped memory for tpu_custom_call.1']
    #allocation5 [shape = 'u8[8192]{0}', space=vmem, size = 0x2000, scoped, tag = 'input window, operand 1']
    #allocation6 [shape = 's32[2]{0}', space=sflag, size = 0x8, scoped, tag = 'scoped memory for tpu_custom_call.1']
    #allocation7 [shape = 'u8[65536]{0}', space=vmem, size = 0x10000, scoped, tag = 'output window, operand 0']
    %7 = vsyncpa [#allocation3], 0
    %s8 = scalar_lea.sflag [#allocation3], 1
    %9 = vsyncpa %s8, 0
    %10 = vsyncpa [#allocation6], 0
    %s11 = scalar_lea.sflag [#allocation6], 1
    %12 = vsyncpa %s11, 0
    %13 = vsyncpa [#allocation4], 0
    %s14 = scalar_lea.sflag [#allocation4], 1
    %15 = vsyncpa %s14, 0
    loop: start=0, step=1, limit=4
    $region2: #{tpu_custom_call.1} parent=1 // loop_pre_header
      _
    $region3: #{tpu_custom_call.1} parent=1 // loop_header
      %s17 = sphi 0, %s21
      %p18 = scmp.ge.s32.totalorder %s17, 4
      %s27 = sphi 0, %s29
      %s30 = sphi 0, %s27
      %s31 = sphi 0, %s30
      %s47 = sphi 0, %s31
      %s53 = sphi 0, %s55
      %s56 = sphi 0, %s53
      %s57 = sphi 0, %s56
      %s73 = sphi 0, %s57
      %s79 = sphi 0, %s81
      %s82 = sphi 0, %s79
      %s83 = sphi 0, %s82
      %s99 = sphi 0, %s83
    $region4: #{tpu_custom_call.1} parent=1 // loop_header_branch
      %20 = sbr.rel (%p18) target = $region8
    $region5: #{tpu_custom_call.1} parent=1 // loop_body
      %s22 = ssub.s32 %s17, 1
      %s23 = ssub.s32 %s17, 2
      %s24 = sadd.s32 %s17, 1
      %s25 = ssub.s32 %s17, %s24
      %p26 = scmp.eq.s32.totalorder %s25, 0
      %s28 = sadd.s32 %s27, 1
      %s29 = scalar_select %p26, %s27, %s28
      %p32 = pneg %p26
      %p33 = scmp.eq.s32.totalorder %s17, 1
      %p34 = por %p32, %p33
      %p35 = scmp.ne.s32.totalorder %s27, %s30
      %p36 = scmp.eq.s32.totalorder %s17, 0
      %p37 = por %p35, %p36
      %p38 = scmp.ne.s32.totalorder %s27, %s30
      %p39 = scmp.eq.s32.totalorder %s22, 1
      %p40 = por %p38, %p39
      %p41 = scmp.ne.s32.totalorder %s30, %s31
      %p42 = scmp.eq.s32.totalorder %s22, 0
      %p43 = por %p41, %p42
      %p44 = scmp.ne.s32.totalorder %s30, %s31
      %p45 = scmp.eq.s32.totalorder %s23, 1
      %p46 = por %p44, %p45
      %p48 = scmp.ne.s32.totalorder %s31, %s47
      %p49 = scmp.eq.s32.totalorder %s23, 0
      %p50 = por %p48, %p49
      %s51 = ssub.s32 %s17, %s24
      %p52 = scmp.eq.s32.totalorder %s51, 0
      %s54 = sadd.s32 %s53, 1
      %s55 = scalar_select %p52, %s53, %s54
      %p58 = pneg %p52
      %p59 = scmp.eq.s32.totalorder %s17, 1
      %p60 = por %p58, %p59
      %p61 = scmp.ne.s32.totalorder %s53, %s56
      %p62 = scmp.eq.s32.totalorder %s17, 0
      %p63 = por %p61, %p62
      %p64 = scmp.ne.s32.totalorder %s53, %s56
      %p65 = scmp.eq.s32.totalorder %s22, 1
      %p66 = por %p64, %p65
      %p67 = scmp.ne.s32.totalorder %s56, %s57
      %p68 = scmp.eq.s32.totalorder %s22, 0
      %p69 = por %p67, %p68
      %p70 = scmp.ne.s32.totalorder %s56, %s57
      %p71 = scmp.eq.s32.totalorder %s23, 1
      %p72 = por %p70, %p71
      %p74 = scmp.ne.s32.totalorder %s57, %s73
      %p75 = scmp.eq.s32.totalorder %s23, 0
      %p76 = por %p74, %p75
      %s77 = ssub.s32 %s17, %s24
      %p78 = scmp.eq.s32.totalorder %s77, 0
      %s80 = sadd.s32 %s79, 1
      %s81 = scalar_select %p78, %s79, %s80
      %p84 = pneg %p78
      %p85 = scmp.eq.s32.totalorder %s17, 1
      %p86 = por %p84, %p85
      %p87 = scmp.ne.s32.totalorder %s79, %s82
      %p88 = scmp.eq.s32.totalorder %s17, 0
      %p89 = por %p87, %p88
      %p90 = scmp.ne.s32.totalorder %s79, %s82
      %p91 = scmp.eq.s32.totalorder %s22, 1
      %p92 = por %p90, %p91
      %p93 = scmp.ne.s32.totalorder %s82, %s83
      %p94 = scmp.eq.s32.totalorder %s22, 0
      %p95 = por %p93, %p94
      %p96 = scmp.ne.s32.totalorder %s82, %s83
      %p97 = scmp.eq.s32.totalorder %s23, 1
      %p98 = por %p96, %p97
      %p100 = scmp.ne.s32.totalorder %s83, %s99
      %p101 = scmp.eq.s32.totalorder %s23, 0
      %p102 = por %p100, %p101
      %p103 = scmp.le.s32.totalorder 1, %s17
      %p104 = scmp.lt.s32.totalorder %s17, 3
      %p105 = pnand %p103, %p104
      %p106 = pneg %p105
      // Predicated region
      $region9: #{tpu_custom_call.1} parent=5 // pred_check
        _
      $region10: #{tpu_custom_call.1} parent=5 // pred_check_branch
        %108 = sbr.rel (%p105) target = $region12
      $region11: #{tpu_custom_call.1} parent=5 // pred_region
        %s109 = ssub.s32 %s17, 1
      $region12: #{tpu_custom_call.1} parent=5 // pred_fallthru
        _
      %p110 = scmp.lt.s32.totalorder %s17, 2
      // Predicated region
      $region13: #{tpu_custom_call.1} parent=5 // pred_check
        %p111 = pneg %p110
      $region14: #{tpu_custom_call.1} parent=5 // pred_check_branch
        %113 = sbr.rel (%p111) target = $region16
      $region15: #{tpu_custom_call.1} parent=5 // pred_region
        // Predicated region
        $region17: #{tpu_custom_call.1} parent=15 // pred_check
          %p114 = pneg %p37
        $region18: #{tpu_custom_call.1} parent=15 // pred_check_branch
          %116 = sbr.rel (%p114) target = $region20
        $region19: #{tpu_custom_call.1} parent=15 // pred_region
          %s117 = sand.u32 %s27, 1
          %s118 = scalar_lea.sflag [#allocation3], %s117
          %s119 = sand.u32 %s27, 1
          %s120 = smul.addr %s119, 64
          %s121 = scalar_lea.vmem [#allocation2], %s120
          %s122 = smul.u32 8, %s17
          %s124 = ssub.s32 1024, 1024
          %125 = vsyncadd %s118, %s124
          %s126 = smul.addr %s122, 128
          %s127 = scalar_lea.hbm %s0, %s126
          %s128 = sshll.u32 %s121, 4
          %s129 = int_to_ptr.vmem [resolvable:$true] %s128
          %134 = dma.hbm_to_vmem [thread:$0]  %s127, 1024, %s129, %s118, 128, 128, 8
        $region20: #{tpu_custom_call.1} parent=15 // pred_fallthru
          _
        // Predicated region
        $region21: #{tpu_custom_call.1} parent=15 // pred_check
          %p135 = pneg %p63
        $region22: #{tpu_custom_call.1} parent=15 // pred_check_branch
          %137 = sbr.rel (%p135) target = $region24
        $region23: #{tpu_custom_call.1} parent=15 // pred_region
          %s138 = sand.u32 %s53, 1
          %s139 = scalar_lea.sflag [#allocation6], %s138
          %s140 = sand.u32 %s53, 1
          %s141 = smul.addr %s140, 8
          %s142 = scalar_lea.vmem [#allocation5], %s141
          %s144 = ssub.s32 128, 128
          %145 = vsyncadd %s139, %s144
          %s146 = smul.addr %s17, 128
          %s147 = scalar_lea.hbm %s1, %s146
          %s149 = sshll.u32 %s142, 4
          %s150 = int_to_ptr.vmem [resolvable:$true] %s149
          %152 = dma.hbm_to_vmem [thread:$0]  %s147, 128, %s150, %s139
        $region24: #{tpu_custom_call.1} parent=15 // pred_fallthru
          _
      $region16: #{tpu_custom_call.1} parent=5 // pred_fallthru
        _
      %p153 = scmp.le.s32.totalorder 1, %s17
      %p154 = scmp.lt.s32.totalorder %s17, 3
      %p155 = pnand %p153, %p154
      %p156 = pneg %p155
      // Predicated region
      $region25: #{tpu_custom_call.1} parent=5 // pred_check
        _
      $region26: #{tpu_custom_call.1} parent=5 // pred_check_branch
        %158 = sbr.rel (%p155) target = $region28
      $region27: #{tpu_custom_call.1} parent=5 // pred_region
        %s159 = ssub.s32 %s17, 1
        %s160 = sand.u32 %s30, 1
        %s161 = scalar_lea.sflag [#allocation3], %s160
        %s162 = sand.u32 %s30, 1
        %s163 = smul.addr %s162, 64
        %s164 = scalar_lea.vmem [#allocation2], %s163
        // Predicated region
        $region29: #{tpu_custom_call.1} parent=27 // pred_check
          %p165 = pneg %p43
        $region30: #{tpu_custom_call.1} parent=27 // pred_check_branch
          %167 = sbr.rel (%p165) target = $region32
        $region31: #{tpu_custom_call.1} parent=27 // pred_region
          %168 = dma.done %s161, 1024
        $region32: #{tpu_custom_call.1} parent=27 // pred_fallthru
          _
        %s169 = sand.u32 %s56, 1
        %s170 = scalar_lea.sflag [#allocation6], %s169
        %s171 = sand.u32 %s56, 1
        %s172 = smul.addr %s171, 8
        %s173 = scalar_lea.vmem [#allocation5], %s172
        // Predicated region
        $region33: #{tpu_custom_call.1} parent=27 // pred_check
          %p174 = pneg %p69
        $region34: #{tpu_custom_call.1} parent=27 // pred_check_branch
          %176 = sbr.rel (%p174) target = $region36
        $region35: #{tpu_custom_call.1} parent=27 // pred_region
          %177 = dma.done %s170, 128
        $region36: #{tpu_custom_call.1} parent=27 // pred_fallthru
          _
        %s178 = sand.u32 %s30, 1
        %s179 = scalar_lea.sflag [#allocation3], %s178
        %s180 = sand.u32 %s30, 1
        %s181 = smul.addr %s180, 64
        %s182 = scalar_lea.vmem [#allocation2], %s181
        %p183 = pneg %p43
        %p184 = pneg %p40
        %s185 = sand.u32 %s56, 1
        %s186 = scalar_lea.sflag [#allocation6], %s185
        %s187 = sand.u32 %s56, 1
        %s188 = smul.addr %s187, 8
        %s189 = scalar_lea.vmem [#allocation5], %s188
        %p190 = pneg %p69
        %p191 = pneg %p66
        %p192 = pneg %p95
        %p193 = pneg %p92
        %s194 = sand.u32 %s82, 1
        %s195 = scalar_lea.sflag [#allocation4], %s194
        %s196 = sand.u32 %s82, 1
        %s197 = smul.addr %s196, 64
        %s198 = scalar_lea.vmem [#allocation7], %s197
        %s199 = smul.u32 8, %s22
        %s200 = smul.u32 8, %s22
        %v201 = vld [vmem:[%s164] sm:$0xff]
        %v202 = vld [vmem:[%s164 + $0x8] sm:$0xff]
        %v203 = vld [vmem:[%s164 + $0x10] sm:$0xff]
        %v204 = vld [vmem:[%s164 + $0x18] sm:$0xff]
        %v205 = vld [vmem:[%s164 + $0x20] sm:$0xff]
        %v206 = vld [vmem:[%s164 + $0x28] sm:$0xff]
        %v207 = vld [vmem:[%s164 + $0x30] sm:$0xff]
        %v208 = vld [vmem:[%s164 + $0x38] sm:$0xff]
        %v209 = vld [vmem:[%s173] sm:$0xff]
        %v211 = vcombine.high %v209, %v209
        %v213 = vunpack.c.l.s4 1966171168
        %v214 = vunpack.c.0.s8 %v213
        %v215 = vlaneseq
        %v216 = vshrl.u32 %v215, 7
        %v217 = vsub.s32 %v214, %v216
        %v218 = vrot.slane %v209, %v217
        %v220 = vunpack.c.l.s4 1966171168
        %v221 = vunpack.c.0.s8 %v220
        %v222 = vlaneseq
        %v223 = vshrl.u32 %v222, 7
        %v224 = vsub.s32 %v221, %v223
        %v225 = vrot.slane %v211, %v224
        %v226 = vcombine.high %v218, %v218
        %v227 = vcombine.high %v225, %v225
        %v229 = vunpack.c.l.s4 1966171168
        %v230 = vunpack.c.0.s8 %v229
        %v231 = vlaneseq
        %v232 = vshrl.u32 %v231, 7
        %v233 = vsub.s32 %v230, %v232
        %v234 = vrot.slane %v218, %v233
        %v236 = vunpack.c.l.s4 1966171168
        %v237 = vunpack.c.0.s8 %v236
        %v238 = vlaneseq
        %v239 = vshrl.u32 %v238, 7
        %v240 = vsub.s32 %v237, %v239
        %v241 = vrot.slane %v225, %v240
        %v243 = vunpack.c.l.s4 1966171168
        %v244 = vunpack.c.0.s8 %v243
        %v245 = vlaneseq
        %v246 = vshrl.u32 %v245, 7
        %v247 = vsub.s32 %v244, %v246
        %v248 = vrot.slane %v226, %v247
        %v250 = vunpack.c.l.s4 1966171168
        %v251 = vunpack.c.0.s8 %v250
        %v252 = vlaneseq
        %v253 = vshrl.u32 %v252, 7
        %v254 = vsub.s32 %v251, %v253
        %v255 = vrot.slane %v227, %v254
        %v256 = vcombine.high %v234, %v234
        %v257 = vcombine.high %v241, %v241
        %v258 = vcombine.high %v248, %v248
        %v259 = vcombine.high %v255, %v255
        %v260 = vlaneseq
        %v261 = vshrl.u32 %v260, 7
        %v262 = vsub.s32 0, %v261
        %v263 = vrot.slane %v234, %v262
        %v264 = vlaneseq
        %v265 = vshrl.u32 %v264, 7
        %v266 = vsub.s32 0, %v265
        %v267 = vrot.slane %v248, %v266
        %v268 = vlaneseq
        %v269 = vshrl.u32 %v268, 7
        %v270 = vsub.s32 0, %v269
        %v271 = vrot.slane %v256, %v270
        %v272 = vlaneseq
        %v273 = vshrl.u32 %v272, 7
        %v274 = vsub.s32 0, %v273
        %v275 = vrot.slane %v258, %v274
        %v276 = vlaneseq
        %v277 = vshrl.u32 %v276, 7
        %v278 = vsub.s32 0, %v277
        %v279 = vrot.slane %v241, %v278
        %v280 = vlaneseq
        %v281 = vshrl.u32 %v280, 7
        %v282 = vsub.s32 0, %v281
        %v283 = vrot.slane %v255, %v282
        %v284 = vlaneseq
        %v285 = vshrl.u32 %v284, 7
        %v286 = vsub.s32 0, %v285
        %v287 = vrot.slane %v257, %v286
        %v288 = vlaneseq
        %v289 = vshrl.u32 %v288, 7
        %v290 = vsub.s32 0, %v289
        %v291 = vrot.slane %v259, %v290
        %v300 = vadd.f32 %v201, %v263
        %v301 = vadd.f32 %v202, %v267
        %v302 = vadd.f32 %v203, %v271
        %v303 = vadd.f32 %v204, %v275
        %v304 = vadd.f32 %v205, %v279
        %v305 = vadd.f32 %v206, %v283
        %v306 = vadd.f32 %v207, %v287
        %v307 = vadd.f32 %v208, %v291
        %308 = vst [vmem:[%s198] sm:$0xff] %v300
        %309 = vst [vmem:[%s198 + $0x8] sm:$0xff] %v301
        %310 = vst [vmem:[%s198 + $0x10] sm:$0xff] %v302
        %311 = vst [vmem:[%s198 + $0x18] sm:$0xff] %v303
        %312 = vst [vmem:[%s198 + $0x20] sm:$0xff] %v304
        %313 = vst [vmem:[%s198 + $0x28] sm:$0xff] %v305
        %314 = vst [vmem:[%s198 + $0x30] sm:$0xff] %v306
        %315 = vst [vmem:[%s198 + $0x38] sm:$0xff] %v307
        %s316 = sand.u32 %s82, 1
        %s317 = scalar_lea.sflag [#allocation4], %s316
        %s318 = sand.u32 %s82, 1
        %s319 = smul.addr %s318, 64
        %s320 = scalar_lea.vmem [#allocation7], %s319
        // Predicated region
        $region37: #{tpu_custom_call.1} parent=27 // pred_check
          %p321 = pneg %p92
        $region38: #{tpu_custom_call.1} parent=27 // pred_check_branch
          %323 = sbr.rel (%p321) target = $region40
        $region39: #{tpu_custom_call.1} parent=27 // pred_region
          %s324 = smul.u32 8, %s22
          %s326 = ssub.s32 1024, 1024
          %327 = vsyncadd %s317, %s326
          %s328 = smul.addr %s324, 128
          %s329 = scalar_lea.hbm %s2, %s328
          %s330 = sshll.u32 %s320, 4
          %s331 = int_to_ptr.vmem [resolvable:$true] %s330
          %336 = dma.vmem_to_hbm [thread:$0]  %s331, 1024, %s329, %s317, 128, 128, 8
        $region40: #{tpu_custom_call.1} parent=27 // pred_fallthru
          _
      $region28: #{tpu_custom_call.1} parent=5 // pred_fallthru
        _
      %p337 = scmp.le.s32.totalorder 2, %s17
      // Predicated region
      $region41: #{tpu_custom_call.1} parent=5 // pred_check
        %p338 = pneg %p337
      $region42: #{tpu_custom_call.1} parent=5 // pred_check_branch
        %340 = sbr.rel (%p338) target = $region44
      $region43: #{tpu_custom_call.1} parent=5 // pred_region
        %s341 = ssub.s32 %s17, 2
        // Predicated region
        $region45: #{tpu_custom_call.1} parent=43 // pred_check
          %p342 = pneg %p98
        $region46: #{tpu_custom_call.1} parent=43 // pred_check_branch
          %344 = sbr.rel (%p342) target = $region48
        $region47: #{tpu_custom_call.1} parent=43 // pred_region
          %s345 = sand.u32 %s83, 1
          %s346 = scalar_lea.sflag [#allocation4], %s345
          %s347 = sand.u32 %s83, 1
          %s348 = smul.addr %s347, 64
          %s349 = scalar_lea.vmem [#allocation7], %s348
          %350 = dma.done %s346, 1024
        $region48: #{tpu_custom_call.1} parent=43 // pred_fallthru
          _
      $region44: #{tpu_custom_call.1} parent=5 // pred_fallthru
        _
    $region6: #{tpu_custom_call.1} parent=1 // loop_footer
      %s21 = sadd.s32 1, %s17
    $region7: #{tpu_custom_call.1} parent=1 // loop_footer_branch
      %16 = sbr.rel target = $region3
    $region8: #{tpu_custom_call.1} parent=1 // loop_exit
      _
    %351 = vsyncpa [#allocation3], 1
    %s352 = scalar_lea.sflag [#allocation3], 1
    %353 = vsyncpa %s352, 1
    %354 = vsyncpa [#allocation6], 1
    %s355 = scalar_lea.sflag [#allocation6], 1
    %356 = vsyncpa %s355, 1
    %357 = vsyncpa [#allocation4], 1
    %s358 = scalar_lea.sflag [#allocation4], 1
    %359 = vsyncpa %s358, 1

</llo_original>
